<compile_context>
chip_gen: v7x
topology: tpu7x:2x2x1
jax: 0.10.0
libtpu: 0.0.40
codegen_flags: <defaults>
</compile_context>

<pallas_src>
import functools

import jax
import jax.numpy as jnp
from jax.experimental import pallas as pl
from jax.experimental.pallas import tpu as pltpu

IGNORE_INDEX = 255


def _ce_loss_kernel(x_ref, t_ref, sum_out_ref, cnt_out_ref, sum_ref, cnt_ref, *,
                    hw, tile_hw, tiles_per_split, num_classes, needs_mask):
    c = pl.program_id(0)   # split axis ("parallel": sharded across TCs on v7x)
    n = pl.program_id(1)   # batch (reduction)
    j = pl.program_id(2)   # HW tile within this split (reduction)

    # Reset the per-core accumulators at the start of every split's range.
    @pl.when(jnp.logical_and(n == 0, j == 0))
    def _():
        sum_ref[...] = jnp.zeros_like(sum_ref)
        cnt_ref[...] = jnp.zeros_like(cnt_ref)

    x = x_ref[...]                       # (C, tile_hw), native dtype (f32 or bf16)
    t = t_ref[...]                       # (1, tile_hw), int32

    # Shifted-domain log-softmax: loss = log(sum(exp(x - m))) - (x_t - m).
    # Keep max / subtract / one-hot select in the native dtype; only the exp
    # path and the (1, tile_hw) rows / accumulators are f32.
    m = jnp.max(x, axis=0, keepdims=True)                                # (1, tile_hw)
    xm = x - m                                                           # (C, tile_hw)
    lse = jnp.log(jnp.sum(jnp.exp(xm.astype(jnp.float32)),
                          axis=0, keepdims=True))                        # (1, tile_hw) f32

    # Target-class (shifted) logit via one-hot compare+select on sublanes
    # (VPU only, no gather / no MXU).
    cls = jax.lax.broadcasted_iota(jnp.int32, (num_classes, tile_hw), 0)
    sel = jnp.sum(jnp.where(cls == t, xm, 0.0),
                  axis=0, keepdims=True).astype(jnp.float32)             # (1, tile_hw)

    loss = lse - sel                      # -log_softmax at target class
    # NOTE: labels outside [0, C) other than IGNORE_INDEX silently contribute
    # `lse` to the loss (PyTorch would raise); accepted, undocumented upstream.
    valid_f = (t != IGNORE_INDEX).astype(jnp.float32)   # mask-multiply form

    if needs_mask:
        # Tail / duplicated (clamped) blocks: gate BOTH loss and count.  Use a
        # select for the loss so garbage logits in never-valid lanes cannot
        # leak NaN/Inf through 0 * NaN.
        pos = (jax.lax.broadcasted_iota(jnp.int32, (1, tile_hw), 1)
               + (c * tiles_per_split + j) * tile_hw)
        in_range = pos < hw
        valid_f = jnp.where(in_range, valid_f, 0.0)
        loss = jnp.where(in_range, loss, 0.0)

    # Per-lane vector accumulation (no per-step cross-lane reduction).
    sum_ref[...] += valid_f * loss
    cnt_ref[...] += valid_f

    # Per-split finalize: each core writes its OWN partial (sum, count); the
    # final add + divide happens in the JAX wrapper.
    @pl.when(jnp.logical_and(n == pl.num_programs(1) - 1,
                             j == pl.num_programs(2) - 1))
    def _():
        sum_out_ref[...] = jnp.sum(sum_ref[...]).reshape(1, 1)
        cnt_out_ref[...] = jnp.sum(cnt_ref[...]).reshape(1, 1)


def _vmem_capacity_bytes():
    try:
        return int(pltpu.get_tpu_info().vmem_capacity_bytes)
    except Exception:
        return 128 * 1024 * 1024   # v5e/v6e default


def _pick_tile_hw(num_classes, hw, x_itemsize, t_itemsize, budget_bytes):
    # Per-lane VMEM bytes:
    #   double-buffered logits + target blocks,
    #   the two f32 accumulator rows,
    #   in-kernel C-sized temporaries (xm, exp(xm), class iota, one-hot select;
    #   counted at f32 width to stay conservative),
    #   and a handful of (1, tile_hw) rows (lse, sel, loss, valid, pos, ...).
    per_lane = (2 * (num_classes * x_itemsize + t_itemsize)
                + 2 * 4
                + 4 * num_classes * 4
                + 8 * 4)
    max_tile = max(128, (budget_bytes // per_lane) // 128 * 128)
    if hw <= max_tile:
        return hw            # one block spans full H*W (no 128 constraint needed)
    return max_tile          # multiple of 128; tail masked in-kernel


def cross_entropy_loss_2d(inputs, targets):
    """inputs: (N, C, H, W) float logits; targets: (N, H, W) int labels."""
    N, C, H, W = inputs.shape
    HW = H * W

    # Free, layout-preserving reshapes only — no transpose / pad passes in HBM.
    x = inputs.reshape(N, C, HW)
    t = targets.reshape(N, 1, HW)
    if t.dtype != jnp.int32:
        # TODO(synk): load narrow integer labels natively and widen in-kernel to
        # avoid this extra HBM pass; int32 upstream skips it entirely.
        t = t.astype(jnp.int32)

    cap = _vmem_capacity_bytes()
    budget = cap // 4        # ~32 MiB on 128 MiB parts, ~16 MiB on v7x (64 MiB/TC)
    vmem_limit = cap // 2    # leave headroom for compiler temporaries

    tile_hw = _pick_tile_hw(C, HW, x.dtype.itemsize, t.dtype.itemsize, budget)
    num_hw_tiles = pl.cdiv(HW, tile_hw)

    # Leading "parallel" split of the HW-tile range: on v7x each TensorCore
    # takes one split; on 1-TC chips the single core runs both back-to-back.
    num_splits = 2 if num_hw_tiles >= 2 else 1
    tiles_per_split = pl.cdiv(num_hw_tiles, num_splits)
    needs_mask = (HW % tile_hw != 0) or (num_splits * tiles_per_split != num_hw_tiles)
    # TODO(synk): when num_hw_tiles == 1 but N >= 2, split the N axis instead so
    # small-spatial batches still use both v7x TensorCores.

    kernel = functools.partial(
        _ce_loss_kernel, hw=HW, tile_hw=tile_hw,
        tiles_per_split=tiles_per_split, num_classes=C, needs_mask=needs_mask)

    def in_map(c, n, j):
        # Clamp out-of-range (duplicated) tile indices of an uneven split to the
        # last real block; those lanes are fully masked in-kernel.
        return (n, 0, jnp.minimum(c * tiles_per_split + j, num_hw_tiles - 1))

    part_sum, part_cnt = pl.pallas_call(
        kernel,
        out_shape=(jax.ShapeDtypeStruct((num_splits, 1, 1), jnp.float32),
                   jax.ShapeDtypeStruct((num_splits, 1, 1), jnp.float32)),
        grid_spec=pltpu.PrefetchScalarGridSpec(
            num_scalar_prefetch=0,
            grid=(num_splits, N, tiles_per_split),
            in_specs=[
                pl.BlockSpec((None, C, tile_hw), in_map),
                pl.BlockSpec((None, 1, tile_hw), in_map),
            ],
            out_specs=[
                pl.BlockSpec((None, 1, 1), lambda c, n, j: (c, 0, 0)),
                pl.BlockSpec((None, 1, 1), lambda c, n, j: (c, 0, 0)),
            ],
            scratch_shapes=[
                pltpu.VMEM((1, tile_hw), jnp.float32),   # per-lane loss sums
                pltpu.VMEM((1, tile_hw), jnp.float32),   # per-lane valid counts
            ],
        ),
        compiler_params=pltpu.CompilerParams(
            dimension_semantics=("parallel", "arbitrary", "arbitrary"),
            vmem_limit_bytes=vmem_limit,
        ),
    )(x, t)

    total = jnp.sum(part_sum)
    count = jnp.sum(part_cnt)
    # NOTE: count == 0 (all pixels ignored) yields NaN, matching PyTorch mean.
    return total / count


def _reference(inputs, targets):
    logp = jax.nn.log_softmax(inputs.astype(jnp.float32), axis=1)   # (N,C,H,W)
    t = targets.astype(jnp.int32)
    safe_t = jnp.where(t == IGNORE_INDEX, 0, t)
    picked = jnp.take_along_axis(logp, safe_t[:, None, :, :], axis=1)[:, 0]
    valid = (t != IGNORE_INDEX)
    nll = jnp.where(valid, -picked, 0.0)
    return jnp.sum(nll) / jnp.sum(valid.astype(jnp.float32))


if __name__ == "__main__":
    key = jax.random.PRNGKey(0)
    k1, k2, k3 = jax.random.split(key, 3)

    N, C, H, W = 2, 4, 16, 16
    inputs = jax.random.normal(k1, (N, C, H, W), dtype=jnp.float32)
    targets = jax.random.randint(k2, (N, H, W), 0, C, dtype=jnp.int32)
    # sprinkle some ignore_index pixels
    ignore_mask = jax.random.uniform(k3, (N, H, W)) < 0.1
    targets = jnp.where(ignore_mask, IGNORE_INDEX, targets)

    loss = cross_entropy_loss_2d(inputs, targets)
    jax.block_until_ready(loss)

    ref = _reference(inputs, targets)
    assert jnp.allclose(loss, ref, atol=1e-5, rtol=1e-5), (loss, ref)
    print("KERNEL_OK")
</pallas_src>

<mosaic_0001>
module attributes {stable_mosaic.version = 11 : i64} {
  func.func @_ce_loss_kernel(%arg0: i32, %arg1: i32, %arg2: i32, %arg3: memref<1x4x256xf32, #tpu.memory_space<vmem>>, %arg4: memref<1x1x256xi32, #tpu.memory_space<vmem>>, %arg5: memref<1x1x1xf32, #tpu.memory_space<vmem>>, %arg6: memref<1x1x1xf32, #tpu.memory_space<vmem>>, %arg7: memref<1x256xf32, #tpu.memory_space<vmem>>, %arg8: memref<1x256xf32, #tpu.memory_space<vmem>>) attributes {dimension_semantics = [#tpu.dimension_semantics<parallel>, #tpu.dimension_semantics<arbitrary>, #tpu.dimension_semantics<arbitrary>], iteration_bounds = array<i64: 1, 2, 1>, scalar_prefetch = 0 : i64, scratch_operands = 2 : i64, tpu.core_type = #tpu.core_type<tc>, window_params = [{transform_indices = @transform_0, window_bounds = array<i64: 1, 4, 256>}, {transform_indices = @transform_1, window_bounds = array<i64: 1, 1, 256>}, {transform_indices = @transform_2, window_bounds = array<i64: 1, 1, 1>}, {transform_indices = @transform_3, window_bounds = array<i64: 1, 1, 1>}]} {
    %c0_i32 = arith.constant 0 : i32
    %0 = arith.cmpi eq, %arg1, %c0_i32 : i32
    %c0_i32_0 = arith.constant 0 : i32
    %1 = arith.cmpi eq, %arg2, %c0_i32_0 : i32
    %2 = arith.andi %0, %1 : i1
    %3 = arith.extui %2 : i1 to i32
    %c0_i32_1 = arith.constant 0 : i32
    %4 = arith.cmpi ne, %3, %c0_i32_1 : i32
    scf.if %4 {
      %cst_20 = arith.constant 0.000000e+00 : f32
      %41 = vector.broadcast %cst_20 : f32 to vector<1x256xf32>
      %c0_21 = arith.constant 0 : index
      %c0_22 = arith.constant 0 : index
      %42 = vector.load %arg7[%c0_21, %c0_22] : memref<1x256xf32, #tpu.memory_space<vmem>>, vector<1x256xf32>
      tpu.vector_store %arg7[%c0_21, %c0_22], %41 {strides = array<i32>} : memref<1x256xf32, #tpu.memory_space<vmem>>, vector<1x256xf32>,
      %cst_23 = arith.constant 0.000000e+00 : f32
      %43 = vector.broadcast %cst_23 : f32 to vector<1x256xf32>
      %c0_24 = arith.constant 0 : index
      %c0_25 = arith.constant 0 : index
      %44 = vector.load %arg8[%c0_24, %c0_25] : memref<1x256xf32, #tpu.memory_space<vmem>>, vector<1x256xf32>
      tpu.vector_store %arg8[%c0_24, %c0_25], %43 {strides = array<i32>} : memref<1x256xf32, #tpu.memory_space<vmem>>, vector<1x256xf32>,
    } else {
    }
    %c0 = arith.constant 0 : index
    %c0_2 = arith.constant 0 : index
    %c0_3 = arith.constant 0 : index
    %5 = vector.load %arg3[%c0, %c0_2, %c0_3] : memref<1x4x256xf32, #tpu.memory_space<vmem>>, vector<1x4x256xf32>
    %6 = vector.shape_cast %5 : vector<1x4x256xf32> to vector<4x256xf32>
    %c0_4 = arith.constant 0 : index
    %c0_5 = arith.constant 0 : index
    %c0_6 = arith.constant 0 : index
    %7 = vector.load %arg4[%c0_4, %c0_5, %c0_6] : memref<1x1x256xi32, #tpu.memory_space<vmem>>, vector<1x1x256xi32>
    %8 = vector.shape_cast %7 : vector<1x1x256xi32> to vector<1x256xi32>
    %cst = arith.constant dense<0xFF800000> : vector<256xf32>
    %9 = vector.multi_reduction <maximumf>, %6, %cst [0] : vector<4x256xf32> to vector<256xf32>
    %10 = vector.shape_cast %9 : vector<256xf32> to vector<1x256xf32>
    %11 = vector.broadcast %10 : vector<1x256xf32> to vector<4x256xf32>
    %12 = arith.subf %6, %11 : vector<4x256xf32>
    %13 = math.exp %12 : vector<4x256xf32>
    %cst_7 = arith.constant dense<0.000000e+00> : vector<256xf32>
    %14 = vector.multi_reduction <add>, %13, %cst_7 [0] : vector<4x256xf32> to vector<256xf32>
    %15 = vector.shape_cast %14 : vector<256xf32> to vector<1x256xf32>
    %16 = math.log %15 : vector<1x256xf32>
    %17 = tpu.iota {dimensions = array<i32: 0>} : vector<4x256xi32>
    %18 = vector.broadcast %8 : vector<1x256xi32> to vector<4x256xi32>
    %19 = arith.cmpi eq, %17, %18 : vector<4x256xi32>
    %cst_8 = arith.constant 0.000000e+00 : f32
    %20 = vector.broadcast %cst_8 : f32 to vector<4x256xf32>
    %21 = arith.select %19, %12, %20 : vector<4x256xi1>, vector<4x256xf32>
    %cst_9 = arith.constant dense<0.000000e+00> : vector<256xf32>
    %22 = vector.multi_reduction <add>, %21, %cst_9 [0] : vector<4x256xf32> to vector<256xf32>
    %23 = vector.shape_cast %22 : vector<256xf32> to vector<1x256xf32>
    %24 = arith.subf %16, %23 : vector<1x256xf32>
    %c255_i32 = arith.constant 255 : i32
    %25 = vector.broadcast %c255_i32 : i32 to vector<1x256xi32>
    %26 = arith.cmpi ne, %8, %25 : vector<1x256xi32>
    %27 = arith.extui %26 : vector<1x256xi1> to vector<1x256xi32>
    %28 = arith.sitofp %27 : vector<1x256xi32> to vector<1x256xf32>
    %c0_10 = arith.constant 0 : index
    %c0_11 = arith.constant 0 : index
    %29 = vector.load %arg7[%c0_10, %c0_11] : memref<1x256xf32, #tpu.memory_space<vmem>>, vector<1x256xf32>
    %30 = arith.mulf %28, %24 : vector<1x256xf32>
    %31 = arith.addf %29, %30 : vector<1x256xf32>
    %c0_12 = arith.constant 0 : index
    %c0_13 = arith.constant 0 : index
    %32 = vector.load %arg7[%c0_12, %c0_13] : memref<1x256xf32, #tpu.memory_space<vmem>>, vector<1x256xf32>
    tpu.vector_store %arg7[%c0_12, %c0_13], %31 {strides = array<i32>} : memref<1x256xf32, #tpu.memory_space<vmem>>, vector<1x256xf32>,
    %c0_14 = arith.constant 0 : index
    %c0_15 = arith.constant 0 : index
    %33 = vector.load %arg8[%c0_14, %c0_15] : memref<1x256xf32, #tpu.memory_space<vmem>>, vector<1x256xf32>
    %34 = arith.addf %33, %28 : vector<1x256xf32>
    %c0_16 = arith.constant 0 : index
    %c0_17 = arith.constant 0 : index
    %35 = vector.load %arg8[%c0_16, %c0_17] : memref<1x256xf32, #tpu.memory_space<vmem>>, vector<1x256xf32>
    tpu.vector_store %arg8[%c0_16, %c0_17], %34 {strides = array<i32>} : memref<1x256xf32, #tpu.memory_space<vmem>>, vector<1x256xf32>,
    %c1_i32 = arith.constant 1 : i32
    %36 = arith.cmpi eq, %arg1, %c1_i32 : i32
    %c0_i32_18 = arith.constant 0 : i32
    %37 = arith.cmpi eq, %arg2, %c0_i32_18 : i32
    %38 = arith.andi %36, %37 : i1
    %39 = arith.extui %38 : i1 to i32
    %c0_i32_19 = arith.constant 0 : i32
    %40 = arith.cmpi ne, %39, %c0_i32_19 : i32
    scf.if %40 {
      %c0_20 = arith.constant 0 : index
      %c0_21 = arith.constant 0 : index
      %41 = vector.load %arg7[%c0_20, %c0_21] : memref<1x256xf32, #tpu.memory_space<vmem>>, vector<1x256xf32>
      %42 = vector.shape_cast %41 : vector<1x256xf32> to vector<1x1x256xf32>
      %cst_22 = arith.constant dense<0.000000e+00> : vector<1xf32>
      %43 = vector.multi_reduction <add>, %42, %cst_22 [1, 2] : vector<1x1x256xf32> to vector<1xf32>
      %44 = vector.shape_cast %43 : vector<1xf32> to vector<1x1x1xf32>
      %45 = vector.extract %44[0, 0, 0] : f32 from vector<1x1x1xf32>
      %46 = vector.broadcast %45 : f32 to vector<1x1xf32>
      %c0_23 = arith.constant 0 : index
      %c0_24 = arith.constant 0 : index
      %c0_25 = arith.constant 0 : index
      %47 = vector.load %arg5[%c0_23, %c0_24, %c0_25] : memref<1x1x1xf32, #tpu.memory_space<vmem>>, vector<1x1x1xf32>
      %48 = vector.shape_cast %47 : vector<1x1x1xf32> to vector<1x1xf32>
      %49 = vector.shape_cast %46 : vector<1x1xf32> to vector<1x1x1xf32>
      tpu.vector_store %arg5[%c0_23, %c0_24, %c0_25], %49 {strides = array<i32>} : memref<1x1x1xf32, #tpu.memory_space<vmem>>, vector<1x1x1xf32>,
      %c0_26 = arith.constant 0 : index
      %c0_27 = arith.constant 0 : index
      %50 = vector.load %arg8[%c0_26, %c0_27] : memref<1x256xf32, #tpu.memory_space<vmem>>, vector<1x256xf32>
      %51 = vector.shape_cast %50 : vector<1x256xf32> to vector<1x1x256xf32>
      %cst_28 = arith.constant dense<0.000000e+00> : vector<1xf32>
      %52 = vector.multi_reduction <add>, %51, %cst_28 [1, 2] : vector<1x1x256xf32> to vector<1xf32>
      %53 = vector.shape_cast %52 : vector<1xf32> to vector<1x1x1xf32>
      %54 = vector.extract %53[0, 0, 0] : f32 from vector<1x1x1xf32>
      %55 = vector.broadcast %54 : f32 to vector<1x1xf32>
      %c0_29 = arith.constant 0 : index
      %c0_30 = arith.constant 0 : index
      %c0_31 = arith.constant 0 : index
      %56 = vector.load %arg6[%c0_29, %c0_30, %c0_31] : memref<1x1x1xf32, #tpu.memory_space<vmem>>, vector<1x1x1xf32>
      %57 = vector.shape_cast %56 : vector<1x1x1xf32> to vector<1x1xf32>
      %58 = vector.shape_cast %55 : vector<1x1xf32> to vector<1x1x1xf32>
      tpu.vector_store %arg6[%c0_29, %c0_30, %c0_31], %58 {strides = array<i32>} : memref<1x1x1xf32, #tpu.memory_space<vmem>>, vector<1x1x1xf32>,
    } else {
    }
    return
  }
  func.func @transform_0(%arg0: i32, %arg1: i32, %arg2: i32) -> (i32, i32, i32) {
    %c1_i32 = arith.constant 1 : i32
    %0 = arith.muli %arg0, %c1_i32 : i32
    %1 = arith.addi %0, %arg2 : i32
    %c0_i32 = arith.constant 0 : i32
    %2 = arith.minsi %1, %c0_i32 : i32
    %c0_i32_0 = arith.constant 0 : i32
    %c0_i32_1 = arith.constant 0 : i32
    return %arg1, %c0_i32_0, %2 : i32, i32, i32
  }
  func.func @transform_1(%arg0: i32, %arg1: i32, %arg2: i32) -> (i32, i32, i32) {
    %c1_i32 = arith.constant 1 : i32
    %0 = arith.muli %arg0, %c1_i32 : i32
    %1 = arith.addi %0, %arg2 : i32
    %c0_i32 = arith.constant 0 : i32
    %2 = arith.minsi %1, %c0_i32 : i32
    %c0_i32_0 = arith.constant 0 : i32
    %c0_i32_1 = arith.constant 0 : i32
    return %arg1, %c0_i32_0, %2 : i32, i32, i32
  }
  func.func @transform_2(%arg0: i32, %arg1: i32, %arg2: i32) -> (i32, i32, i32) {
    %c0_i32 = arith.constant 0 : i32
    %c0_i32_0 = arith.constant 0 : i32
    %c0_i32_1 = arith.constant 0 : i32
    return %arg0, %c0_i32, %c0_i32_0 : i32, i32, i32
  }
  func.func @transform_3(%arg0: i32, %arg1: i32, %arg2: i32) -> (i32, i32, i32) {
    %c0_i32 = arith.constant 0 : i32
    %c0_i32_0 = arith.constant 0 : i32
    %c0_i32_1 = arith.constant 0 : i32
    return %arg0, %c0_i32, %c0_i32_0 : i32, i32, i32
  }
}

</mosaic_0001>

<llo_original>
// kernel: tpu_custom_call.1
$region0: #{tpu_custom_call.1}
  #allocation0 [shape = 'u32[]', space=smem, size = 0x4, offset = 0x4, fixed_abs, tag = 'smem constant byte address 0x4 - core index']
  #allocation1 [shape = 'u32[144,128]{1,0:T(1,128)}', space=vmem, size = 0x12000, scoped, tag = 'internal scratch']
  #allocation2 [shape = 'f32[1,256]{1,0:T(1,128)}', space=vmem, size = 0x400, scoped, tag = 'scratch operand']
  #allocation3 [shape = 'f32[1,256]{1,0:T(1,128)}', space=vmem, size = 0x400, scoped, tag = 'scratch operand']
  %s0 = inlined_call_operand.hbm [shape: f32[2,4,256], index: 0, kind: input, shape index: {}]
  %s1 = inlined_call_operand.hbm [shape: s32[2,1,256], index: 1, kind: input, shape index: {}]
  %s2 = inlined_call_operand.hbm [shape: f32[1,1,1], index: 2, kind: output, shape index: {0}]
  %s3 = inlined_call_operand.hbm [shape: f32[1,1,1], index: 3, kind: output, shape index: {1}]
  %4 = xla_tuple %s2, %s3
  %s5 = sld [smem:[#allocation0]]
  $region65: #{tpu_custom_call.1} parent=0
    _
  %s7 = ssub.s32 1, %s5
  %s8 = scalar_select 0, %s7, %s5
  $region1: #{tpu_custom_call.1} parent=0
    #allocation4 [shape = 'u8[8192]{0}', space=vmem, size = 0x2000, scoped, tag = 'input window, operand 0']
    #allocation5 [shape = 's32[2]{0}', space=sflag, size = 0x8, scoped, tag = 'scoped memory for tpu_custom_call.1']
    #allocation6 [shape = 's32[2]{0}', space=sflag, size = 0x8, scoped, tag = 'scoped memory for tpu_custom_call.1']
    #allocation7 [shape = 'u8[2048]{0}', space=vmem, size = 0x800, scoped, tag = 'input window, operand 1']
    #allocation8 [shape = 's32[2]{0}', space=sflag, size = 0x8, scoped, tag = 'scoped memory for tpu_custom_call.1']
    #allocation9 [shape = 'u8[512]{0}', space=vmem, size = 0x400, scoped, tag = 'output window, operand 0, single buffered']
    #allocation10 [shape = 'u8[512]{0}', space=vmem, size = 0x400, scoped, tag = 'output window, operand 1, single buffered']
    #allocation11 [shape = 's32[1]{0}', space=sflag, size = 0x4, scoped, tag = 'scoped memory for tpu_custom_call.1']
    %9 = vsyncpa [#allocation5], 0
    %s10 = scalar_lea.sflag [#allocation5], 1
    %11 = vsyncpa %s10, 0
    %12 = vsyncpa [#allocation8], 0
    %s13 = scalar_lea.sflag [#allocation8], 1
    %14 = vsyncpa %s13, 0
    %15 = vsyncpa [#allocation6], 0
    %16 = vsyncpa [#allocation11], 0
    loop: start=0, step=1, limit=4
    $region2: #{tpu_custom_call.1} parent=1 // loop_pre_header
      _
    $region3: #{tpu_custom_call.1} parent=1 // loop_header
      %s18 = sphi 0, %s22
      %p19 = scmp.ge.s32.totalorder %s18, 4
      %s25 = sphi 0, %s44
      %s26 = sphi 0, %s40
      %s27 = sphi 0, %s36
      %s28 = sphi 0, %s25
      %s29 = sphi 0, %s26
      %s30 = sphi 0, %s27
      %s31 = sphi 0, %s28
      %s32 = sphi 0, %s29
      %s33 = sphi 0, %s30
      %s55 = sphi 0, %s57
      %s58 = sphi 0, %s55
      %s59 = sphi 0, %s58
      %s75 = sphi 0, %s59
      %s89 = sphi 0, %s91
      %s92 = sphi 0, %s89
      %s93 = sphi 0, %s92
      %s109 = sphi 0, %s93
      %s115 = sphi 0, %s117
      %s118 = sphi 0, %s115
      %s119 = sphi 0, %s118
      %s135 = sphi 0, %s119
      %s141 = sphi 0, %s143
      %s144 = sphi 0, %s141
      %s145 = sphi 0, %s144
      %s161 = sphi 0, %s145
    $region4: #{tpu_custom_call.1} parent=1 // loop_header_branch
      %21 = sbr.rel (%p19) target = $region8
    $region5: #{tpu_custom_call.1} parent=1 // loop_body
      %s23 = ssub.s32 %s18, 1
      %s24 = ssub.s32 %s18, 2
      %s34 = sadd.s32 1, %s27
      %p35 = scmp.ge.s32.totalorder %s34, 1
      %s36 = scalar_select %p35, 0, %s34
      %s37 = sadd.s32 1, %s26
      %s38 = scalar_select %p35, %s37, %s26
      %p39 = scmp.ge.s32.totalorder %s38, 2
      %s40 = scalar_select %p39, 0, %s38
      %s41 = sadd.s32 1, %s25
      %s42 = scalar_select %p39, %s41, %s25
      %p43 = scmp.ge.s32.totalorder %s42, 1
      %s44 = scalar_select %p43, 0, %s42
      %s45 = sadd.s32 %s25, %s27
      %p46 = scmp.lt.s32.totalorder %s45, 0
      %s47 = scalar_select %p46, %s45, 0
      %s48 = sadd.s32 %s44, %s36
      %p49 = scmp.lt.s32.totalorder %s48, 0
      %s50 = scalar_select %p49, %s48, 0
      %s51 = ssub.s32 %s26, %s40
      %s52 = ssub.s32 %s47, %s50
      %s53 = sor.u32 %s51, %s52
      %p54 = scmp.eq.s32.totalorder %s53, 0
      %s56 = sadd.s32 %s55, 1
      %s57 = scalar_select %p54, %s55, %s56
      %p60 = pneg %p54
      %p61 = scmp.eq.s32.totalorder %s18, 1
      %p62 = por %p60, %p61
      %p63 = scmp.ne.s32.totalorder %s55, %s58
      %p64 = scmp.eq.s32.totalorder %s18, 0
      %p65 = por %p63, %p64
      %p66 = scmp.ne.s32.totalorder %s55, %s58
      %p67 = scmp.eq.s32.totalorder %s23, 1
      %p68 = por %p66, %p67
      %p69 = scmp.ne.s32.totalorder %s58, %s59
      %p70 = scmp.eq.s32.totalorder %s23, 0
      %p71 = por %p69, %p70
      %p72 = scmp.ne.s32.totalorder %s58, %s59
      %p73 = scmp.eq.s32.totalorder %s24, 1
      %p74 = por %p72, %p73
      %p76 = scmp.ne.s32.totalorder %s59, %s75
      %p77 = scmp.eq.s32.totalorder %s24, 0
      %p78 = por %p76, %p77
      %s79 = sadd.s32 %s25, %s27
      %p80 = scmp.lt.s32.totalorder %s79, 0
      %s81 = scalar_select %p80, %s79, 0
      %s82 = sadd.s32 %s44, %s36
      %p83 = scmp.lt.s32.totalorder %s82, 0
      %s84 = scalar_select %p83, %s82, 0
      %s85 = ssub.s32 %s26, %s40
      %s86 = ssub.s32 %s81, %s84
      %s87 = sor.u32 %s85, %s86
      %p88 = scmp.eq.s32.totalorder %s87, 0
      %s90 = sadd.s32 %s89, 1
      %s91 = scalar_select %p88, %s89, %s90
      %p94 = pneg %p88
      %p95 = scmp.eq.s32.totalorder %s18, 1
      %p96 = por %p94, %p95
      %p97 = scmp.ne.s32.totalorder %s89, %s92
      %p98 = scmp.eq.s32.totalorder %s18, 0
      %p99 = por %p97, %p98
      %p100 = scmp.ne.s32.totalorder %s89, %s92
      %p101 = scmp.eq.s32.totalorder %s23, 1
      %p102 = por %p100, %p101
      %p103 = scmp.ne.s32.totalorder %s92, %s93
      %p104 = scmp.eq.s32.totalorder %s23, 0
      %p105 = por %p103, %p104
      %p106 = scmp.ne.s32.totalorder %s92, %s93
      %p107 = scmp.eq.s32.totalorder %s24, 1
      %p108 = por %p106, %p107
      %p110 = scmp.ne.s32.totalorder %s93, %s109
      %p111 = scmp.eq.s32.totalorder %s24, 0
      %p112 = por %p110, %p111
      %s113 = ssub.s32 %s25, %s44
      %p114 = scmp.eq.s32.totalorder %s113, 0
      %s116 = sadd.s32 %s115, 1
      %s117 = scalar_select %p114, %s115, %s116
      %p120 = pneg %p114
      %p121 = scmp.eq.s32.totalorder %s18, 1
      %p122 = por %p120, %p121
      %p123 = scmp.ne.s32.totalorder %s115, %s118
      %p124 = scmp.eq.s32.totalorder %s18, 0
      %p125 = por %p123, %p124
      %p126 = scmp.ne.s32.totalorder %s115, %s118
      %p127 = scmp.eq.s32.totalorder %s23, 1
      %p128 = por %p126, %p127
      %p129 = scmp.ne.s32.totalorder %s118, %s119
      %p130 = scmp.eq.s32.totalorder %s23, 0
      %p131 = por %p129, %p130
      %p132 = scmp.ne.s32.totalorder %s118, %s119
      %p133 = scmp.eq.s32.totalorder %s24, 1
      %p134 = por %p132, %p133
      %p136 = scmp.ne.s32.totalorder %s119, %s135
      %p137 = scmp.eq.s32.totalorder %s24, 0
      %p138 = por %p136, %p137
      %s139 = ssub.s32 %s25, %s44
      %p140 = scmp.eq.s32.totalorder %s139, 0
      %s142 = sadd.s32 %s141, 1
      %s143 = scalar_select %p140, %s141, %s142
      %p146 = pneg %p140
      %p147 = scmp.eq.s32.totalorder %s18, 1
      %p148 = por %p146, %p147
      %p149 = scmp.ne.s32.totalorder %s141, %s144
      %p150 = scmp.eq.s32.totalorder %s18, 0
      %p151 = por %p149, %p150
      %p152 = scmp.ne.s32.totalorder %s141, %s144
      %p153 = scmp.eq.s32.totalorder %s23, 1
      %p154 = por %p152, %p153
      %p155 = scmp.ne.s32.totalorder %s144, %s145
      %p156 = scmp.eq.s32.totalorder %s23, 0
      %p157 = por %p155, %p156
      %p158 = scmp.ne.s32.totalorder %s144, %s145
      %p159 = scmp.eq.s32.totalorder %s24, 1
      %p160 = por %p158, %p159
      %p162 = scmp.ne.s32.totalorder %s145, %s161
      %p163 = scmp.eq.s32.totalorder %s24, 0
      %p164 = por %p162, %p163
      %p165 = scmp.le.s32.totalorder 1, %s18
      %p166 = scmp.lt.s32.totalorder %s18, 3
      %p167 = pnand %p165, %p166
      %p168 = pneg %p167
      // Predicated region
      $region9: #{tpu_custom_call.1} parent=5 // pred_check
        _
      $region10: #{tpu_custom_call.1} parent=5 // pred_check_branch
        %170 = sbr.rel (%p167) target = $region12
      $region11: #{tpu_custom_call.1} parent=5 // pred_region
        %s171 = ssub.s32 %s18, 1
      $region12: #{tpu_custom_call.1} parent=5 // pred_fallthru
        _
      %p172 = scmp.lt.s32.totalorder %s18, 2
      // Predicated region
      $region13: #{tpu_custom_call.1} parent=5 // pred_check
        %p173 = pneg %p172
      $region14: #{tpu_custom_call.1} parent=5 // pred_check_branch
        %175 = sbr.rel (%p173) target = $region16
      $region15: #{tpu_custom_call.1} parent=5 // pred_region
        // Predicated region
        $region17: #{tpu_custom_call.1} parent=15 // pred_check
          %p176 = pneg %p65
        $region18: #{tpu_custom_call.1} parent=15 // pred_check_branch
          %178 = sbr.rel (%p176) target = $region20
        $region19: #{tpu_custom_call.1} parent=15 // pred_region
          %s179 = sand.u32 %s55, 1
          %s180 = scalar_lea.sflag [#allocation5], %s179
          %s181 = sand.u32 %s55, 1
          %s182 = smul.addr %s181, 8
          %s183 = scalar_lea.vmem [#allocation4], %s182
          %s184 = sadd.s32 %s25, %s27
          %p185 = scmp.lt.s32.totalorder %s184, 0
          %s186 = scalar_select %p185, %s184, 0
          %s187 = smul.u32 2, %s186
          %s189 = ssub.s32 128, 128
          %190 = vsyncadd %s180, %s189
          %s191 = smul.addr %s26, 2
          %s192 = sadd.s32 %s187, %s191
          %s193 = smul.addr %s192, 64
          %s194 = scalar_lea.hbm %s0, %s193
          %s196 = sshll.u32 %s183, 4
          %s197 = int_to_ptr.vmem [resolvable:$true] %s196
          %199 = dma.hbm_to_vmem [thread:$0]  %s194, 128, %s197, %s180
        $region20: #{tpu_custom_call.1} parent=15 // pred_fallthru
          _
        // Predicated region
        $region21: #{tpu_custom_call.1} parent=15 // pred_check
          %p200 = pneg %p99
        $region22: #{tpu_custom_call.1} parent=15 // pred_check_branch
          %202 = sbr.rel (%p200) target = $region24
        $region23: #{tpu_custom_call.1} parent=15 // pred_region
          %s203 = sand.u32 %s89, 1
          %s204 = scalar_lea.sflag [#allocation8], %s203
          %s205 = sand.u32 %s89, 1
          %s206 = smul.addr %s205, 2
          %s207 = scalar_lea.vmem [#allocation7], %s206
          %s208 = sadd.s32 %s25, %s27
          %p209 = scmp.lt.s32.totalorder %s208, 0
          %s210 = scalar_select %p209, %s208, 0
          %s211 = smul.u32 2, %s210
          %s213 = ssub.s32 32, 32
          %214 = vsyncadd %s204, %s213
          %s215 = smul.addr %s26, 2
          %s216 = sadd.s32 %s211, %s215
          %s217 = smul.addr %s216, 16
          %s218 = scalar_lea.hbm %s1, %s217
          %s220 = sshll.u32 %s207, 4
          %s221 = int_to_ptr.vmem [resolvable:$true] %s220
          %223 = dma.hbm_to_vmem [thread:$0]  %s218, 32, %s221, %s204
        $region24: #{tpu_custom_call.1} parent=15 // pred_fallthru
          _
      $region16: #{tpu_custom_call.1} parent=5 // pred_fallthru
        _
      %p224 = scmp.le.s32.totalorder 1, %s18
      %p225 = scmp.lt.s32.totalorder %s18, 3
      %p226 = pnand %p224, %p225
      %p227 = pneg %p226
      // Predicated region
      $region25: #{tpu_custom_call.1} parent=5 // pred_check
        _
      $region26: #{tpu_custom_call.1} parent=5 // pred_check_branch
        %229 = sbr.rel (%p226) target = $region28
      $region27: #{tpu_custom_call.1} parent=5 // pred_region
        %s230 = ssub.s32 %s18, 1
        %s231 = sand.u32 %s58, 1
        %s232 = scalar_lea.sflag [#allocation5], %s231
        %s233 = sand.u32 %s58, 1
        %s234 = smul.addr %s233, 8
        %s235 = scalar_lea.vmem [#allocation4], %s234
        // Predicated region
        $region29: #{tpu_custom_call.1} parent=27 // pred_check
          %p236 = pneg %p71
        $region30: #{tpu_custom_call.1} parent=27 // pred_check_branch
          %238 = sbr.rel (%p236) target = $region32
        $region31: #{tpu_custom_call.1} parent=27 // pred_region
          %239 = dma.done %s232, 128
        $region32: #{tpu_custom_call.1} parent=27 // pred_fallthru
          _
        %s240 = sand.u32 %s92, 1
        %s241 = scalar_lea.sflag [#allocation8], %s240
        %s242 = sand.u32 %s92, 1
        %s243 = smul.addr %s242, 2
        %s244 = scalar_lea.vmem [#allocation7], %s243
        // Predicated region
        $region33: #{tpu_custom_call.1} parent=27 // pred_check
          %p245 = pneg %p105
        $region34: #{tpu_custom_call.1} parent=27 // pred_check_branch
          %247 = sbr.rel (%p245) target = $region36
        $region35: #{tpu_custom_call.1} parent=27 // pred_region
          %248 = dma.done %s241, 32
        $region36: #{tpu_custom_call.1} parent=27 // pred_fallthru
          _
        %s249 = sand.u32 %s58, 1
        %s250 = scalar_lea.sflag [#allocation5], %s249
        %s251 = sand.u32 %s58, 1
        %s252 = smul.addr %s251, 8
        %s253 = scalar_lea.vmem [#allocation4], %s252
        %p254 = pneg %p71
        %p255 = pneg %p68
        %s256 = sand.u32 %s92, 1
        %s257 = scalar_lea.sflag [#allocation8], %s256
        %s258 = sand.u32 %s92, 1
        %s259 = smul.addr %s258, 2
        %s260 = scalar_lea.vmem [#allocation7], %s259
        %p261 = pneg %p105
        %p262 = pneg %p102
        %p263 = pneg %p131
        %p264 = pneg %p128
        %p265 = pneg %p157
        %p266 = pneg %p154
        %s267 = sadd.s32 %s28, %s30
        %p268 = scmp.lt.s32.totalorder %s267, 0
        %s269 = scalar_select %p268, %s267, 0
        %s270 = smul.u32 2, %s269
        %s271 = sadd.s32 %s28, %s30
        %p272 = scmp.lt.s32.totalorder %s271, 0
        %s273 = scalar_select %p272, %s271, 0
        %s274 = smul.u32 2, %s273
        %p275 = scmp.eq.s32.totalorder %s29, 0
        %p276 = scmp.eq.s32.totalorder %s30, 0
        %p277 = pnand %p275, %p276
        %p278 = pneg %p277
        // Predicated region
        $region37: #{tpu_custom_call.1} parent=27 // pred_check
          _
        $region38: #{tpu_custom_call.1} parent=27 // pred_check_branch
          %280 = sbr.rel (%p277) target = $region40
        $region39: #{tpu_custom_call.1} parent=27 // pred_region
          %v281 = vlaneseq
          %vm282 = vcmp.ge.s32.totalorder %v281, 0
          %vm283 = vcmp.lt.s32.totalorder %v281, 256
          %vm284 = vmand %vm282, %vm283
          %285 = vst.msk [vmem:[#allocation2] sm:$0x3] %vm284, 0.0
          %286 = vst.msk [vmem:[#allocation3] sm:$0x3] %vm284, 0.0
        $region40: #{tpu_custom_call.1} parent=27 // pred_fallthru
          _
        %v287 = vld [vmem:[%s235] sm:$0xff]
        %v288 = vld [vmem:[%s244] sm:$0x3]
        %v290 = vcombine.high %v287, %v287
        %vm292 = vcmask 1043456
        %v293 = vsel %vm292, %v287, -inf
        %v294 = vrot.slane %v293, 4
        %v295 = vmax.f32 %v293, %v294
        %v296 = vrot.slane %v295, 2
        %v297 = vmax.f32 %v295, %v296
        %v298 = vrot.slane %v297, 1
        %v299 = vmax.f32 %v297, %v298
        %v300 = vsel %vm292, %v290, -inf
        %v301 = vrot.slane %v300, 4
        %v302 = vmax.f32 %v300, %v301
        %v303 = vrot.slane %v302, 2
        %v304 = vmax.f32 %v302, %v303
        %v305 = vrot.slane %v304, 1
        %v306 = vmax.f32 %v304, %v305
        %v309 = vcombine.low %v299, %v306
        %v311 = vsub.f32 %v287, %v309
        %v312 = vmul.f32 %v311, 1.442695
        %v313 = vpow.pop %v312
        %v315 = vcombine.high %v313, %v313
        %v317 = vsel %vm292, %v313, 0.0
        %v318 = vrot.slane %v317, 4
        %v319 = vadd.f32 %v317, %v318
        %v320 = vrot.slane %v319, 2
        %v321 = vadd.f32 %v319, %v320
        %v322 = vrot.slane %v321, 1
        %v323 = vadd.f32 %v321, %v322
        %v324 = vsel %vm292, %v315, 0.0
        %v325 = vrot.slane %v324, 4
        %v326 = vadd.f32 %v324, %v325
        %v327 = vrot.slane %v326, 2
        %v328 = vadd.f32 %v326, %v327
        %v329 = vrot.slane %v328, 1
        %v330 = vadd.f32 %v328, %v329
        %v331 = vlog2.pop %v323
        %v332 = vmul.f32 %v331, 0.6931472
        %v333 = vlog2.pop %v330
        %v334 = vmul.f32 %v333, 0.6931472
        %v335 = vlaneseq
        %v336 = vshrl.u32 %v335, 7
        %v337 = vlaneseq
        %v338 = vshrl.u32 %v337, 7
        %v339 = vsub.s32 0, %v338
        %v340 = vrot.slane %v288, %v339
        %v341 = vlaneseq
        %v342 = vshrl.u32 %v341, 7
        %v343 = vsub.s32 1, %v342
        %v344 = vrot.slane %v288, %v343
        %vm345 = vcmp.eq.s32.totalorder %v336, %v340
        %vm346 = vcmp.eq.s32.totalorder %v336, %v344
        %v348 = vcombine.high %v311, %v311
        %v350 = vsel %vm345, %v311, 0.0
        %v351 = vsel %vm346, %v348, 0.0
        %v352 = vsel %vm292, %v350, 0.0
        %v353 = vrot.slane %v352, 4
        %v354 = vadd.f32 %v352, %v353
        %v355 = vrot.slane %v354, 2
        %v356 = vadd.f32 %v354, %v355
        %v357 = vrot.slane %v356, 1
        %v358 = vadd.f32 %v356, %v357
        %v359 = vsel %vm292, %v351, 0.0
        %v360 = vrot.slane %v359, 4
        %v361 = vadd.f32 %v359, %v360
        %v362 = vrot.slane %v361, 2
        %v363 = vadd.f32 %v361, %v362
        %v364 = vrot.slane %v363, 1
        %v365 = vadd.f32 %v363, %v364
        %v366 = vsub.f32 %v332, %v358
        %v367 = vsub.f32 %v334, %v365
        %vm368 = vcmp.ne.s32.totalorder %v288, 255
        %v369 = vsel %vm368, 1, 0
        %v370 = vcvt.s32.f32 %v369
        %v371 = vld [vmem:[#allocation2] sm:$0x3]
        %v374 = vcombine.low %v366, %v367
        %v376 = vunpack.c.l.s4 1966171168
        %v377 = vunpack.c.0.s8 %v376
        %v378 = vlaneseq
        %v379 = vshrl.u32 %v378, 7
        %v380 = vsub.s32 %v377, %v379
        %v381 = vrot.slane %v374, %v380
        %v383 = vunpack.c.l.s4 1966171168
        %v384 = vunpack.c.0.s8 %v383
        %v385 = vlaneseq
        %v386 = vshrl.u32 %v385, 7
        %v387 = vsub.s32 %v384, %v386
        %v388 = vrot.slane %v381, %v387
        %v390 = vmul.f32 %v370, %v388
        %v391 = vadd.f32 %v371, %v390
        %v392 = vlaneseq
        %vm393 = vcmp.ge.s32.totalorder %v392, 0
        %vm394 = vcmp.lt.s32.totalorder %v392, 256
        %vm395 = vmand %vm393, %vm394
        %396 = vst.msk [vmem:[#allocation2] sm:$0x3] %vm395, %v391
        %v397 = vld [vmem:[#allocation3] sm:$0x3]
        %v398 = vadd.f32 %v397, %v370
        %399 = vst.msk [vmem:[#allocation3] sm:$0x3] %vm395, %v398
        %p400 = scmp.eq.s32.totalorder %s29, 1
        %p401 = pnand %p400, %p276
        %p402 = pneg %p401
        // Predicated region
        $region41: #{tpu_custom_call.1} parent=27 // pred_check
          _
        $region42: #{tpu_custom_call.1} parent=27 // pred_check_branch
          %404 = sbr.rel (%p401) target = $region44
        $region43: #{tpu_custom_call.1} parent=27 // pred_region
          %v405 = vld [vmem:[#allocation2] sm:$0x3]
          %v407 = vlaneseq
          %v408 = vshrl.u32 %v407, 7
          %v409 = vsub.s32 0, %v408
          %v410 = vrot.slane %v405, %v409
          %v411 = vlaneseq
          %v412 = vshrl.u32 %v411, 7
          %v413 = vsub.s32 1, %v412
          %v414 = vrot.slane %v405, %v413
          %vm417 = vcmask 1040384
          %v418 = vsel %vm417, %v410, 0.0
          %v419 = vsel %vm417, %v414, 0.0
          %v420 = vadd.f32 %v418, %v419
          %421 = vadd.xlane.f32.xlu0 %v420
          %v422 = vpop.xlane.xlu0 %421
          %v423 = vrot.slane %v422, 4
          %v424 = vadd.f32 %v422, %v423
          %v425 = vrot.slane %v424, 2
          %v426 = vadd.f32 %v424, %v425
          %v427 = vrot.slane %v426, 1
          %v428 = vadd.f32 %v426, %v427
          %s429 = vtos %v428
          %v430 = vstv %s429
          %vm431 = vcmask 0
          %432 = vst.msk [vmem:[#allocation9] sm:$0x1] %vm431, %v430
          %v433 = vld [vmem:[#allocation3] sm:$0x3]
          %v435 = vlaneseq
          %v436 = vshrl.u32 %v435, 7
          %v437 = vsub.s32 0, %v436
          %v438 = vrot.slane %v433, %v437
          %v439 = vlaneseq
          %v440 = vshrl.u32 %v439, 7
          %v441 = vsub.s32 1, %v440
          %v442 = vrot.slane %v433, %v441
          %v445 = vsel %vm417, %v438, 0.0
          %v446 = vsel %vm417, %v442, 0.0
          %v447 = vadd.f32 %v445, %v446
          %448 = vadd.xlane.f32.xlu0 %v447
          %v449 = vpop.xlane.xlu0 %448
          %v450 = vrot.slane %v449, 4
          %v451 = vadd.f32 %v449, %v450
          %v452 = vrot.slane %v451, 2
          %v453 = vadd.f32 %v451, %v452
          %v454 = vrot.slane %v453, 1
          %v455 = vadd.f32 %v453, %v454
          %s456 = vtos %v455
          %v457 = vstv %s456
          %458 = vst.msk [vmem:[#allocation10] sm:$0x1] %vm431, %v457
        $region44: #{tpu_custom_call.1} parent=27 // pred_fallthru
          _
        // Predicated region
        $region45: #{tpu_custom_call.1} parent=27 // pred_check
          %p459 = pneg %p128
        $region46: #{tpu_custom_call.1} parent=27 // pred_check_branch
          %461 = sbr.rel (%p459) target = $region48
        $region47: #{tpu_custom_call.1} parent=27 // pred_region
          %s463 = ssub.s32 16, 16
          %464 = vsyncadd [#allocation6], %s463
          %s465 = smul.addr %s28, 16
          %s466 = scalar_lea.hbm %s2, %s465
          %s468 = sshll.u32 [#allocation9], 4
          %s469 = int_to_ptr.vmem [resolvable:$true] %s468
          %471 = dma.vmem_to_hbm [thread:$0]  %s469, 16, %s466, [#allocation6]
        $region48: #{tpu_custom_call.1} parent=27 // pred_fallthru
          _
        // Predicated region
        $region49: #{tpu_custom_call.1} parent=27 // pred_check
          %p472 = pneg %p154
        $region50: #{tpu_custom_call.1} parent=27 // pred_check_branch
          %474 = sbr.rel (%p472) target = $region52
        $region51: #{tpu_custom_call.1} parent=27 // pred_region
          %s476 = ssub.s32 16, 16
          %477 = vsyncadd [#allocation11], %s476
          %s478 = smul.addr %s28, 16
          %s479 = scalar_lea.hbm %s3, %s478
          %s481 = sshll.u32 [#allocation10], 4
          %s482 = int_to_ptr.vmem [resolvable:$true] %s481
          %484 = dma.vmem_to_hbm [thread:$0]  %s482, 16, %s479, [#allocation11]
        $region52: #{tpu_custom_call.1} parent=27 // pred_fallthru
          _
        // Predicated region
        $region53: #{tpu_custom_call.1} parent=27 // pred_check
          %p485 = pneg %p128
        $region54: #{tpu_custom_call.1} parent=27 // pred_check_branch
          %487 = sbr.rel (%p485) target = $region56
        $region55: #{tpu_custom_call.1} parent=27 // pred_region
          %488 = dma.done [#allocation6], 16
        $region56: #{tpu_custom_call.1} parent=27 // pred_fallthru
          _
        // Predicated region
        $region57: #{tpu_custom_call.1} parent=27 // pred_check
          %p489 = pneg %p154
        $region58: #{tpu_custom_call.1} parent=27 // pred_check_branch
          %491 = sbr.rel (%p489) target = $region60
        $region59: #{tpu_custom_call.1} parent=27 // pred_region
          %492 = dma.done [#allocation11], 16
        $region60: #{tpu_custom_call.1} parent=27 // pred_fallthru
          _
      $region28: #{tpu_custom_call.1} parent=5 // pred_fallthru
        _
      %p493 = scmp.le.s32.totalorder 2, %s18
      // Predicated region
      $region61: #{tpu_custom_call.1} parent=5 // pred_check
        %p494 = pneg %p493
      $region62: #{tpu_custom_call.1} parent=5 // pred_check_branch
        %496 = sbr.rel (%p494) target = $region64
      $region63: #{tpu_custom_call.1} parent=5 // pred_region
        %s497 = ssub.s32 %s18, 2
      $region64: #{tpu_custom_call.1} parent=5 // pred_fallthru
        _
    $region6: #{tpu_custom_call.1} parent=1 // loop_footer
      %s22 = sadd.s32 1, %s18
    $region7: #{tpu_custom_call.1} parent=1 // loop_footer_branch
      %17 = sbr.rel target = $region3
    $region8: #{tpu_custom_call.1} parent=1 // loop_exit
      _
    %498 = vsyncpa [#allocation5], 1
    %s499 = scalar_lea.sflag [#allocation5], 1
    %500 = vsyncpa %s499, 1
    %501 = vsyncpa [#allocation8], 1
    %s502 = scalar_lea.sflag [#allocation8], 1
    %503 = vsyncpa %s502, 1
    %504 = vsyncpa [#allocation6], 1
    %s505 = scalar_lea.sflag [#allocation6], 1
    %506 = vsyncpa %s505, 1
    %507 = vsyncpa [#allocation11], 1

</llo_original>
